<compile_context>
chip_gen: v5e
topology: v5e:2x2
jax: 0.10.0
libtpu: 0.0.40
codegen_flags: <defaults>
</compile_context>

<pallas_src>
import functools

import jax
import jax.numpy as jnp
from jax.experimental import pallas as pl
from jax.experimental.pallas import tpu as pltpu


# ---------------------------------------------------------------------------
# Kernel
# ---------------------------------------------------------------------------
def _mlp_kernel(xt_ref,
                w1_ref, b1_ref,
                w2_ref, b2_ref,
                w3_ref, b3_ref,
                w4_ref, b4_ref,
                o_ref):
    """Fused 4-layer MLP on one batch tile (batch-on-lanes layout).

    xt_ref : (2, bb)   x^T tile (lane-dense)
    w1_ref : (H, 2)    layer-1 weight, PyTorch (out, in) layout, f32
    w2/w3  : (H, H)    layer-2/3 weights, (out, in) layout, f32 or bf16
    w4_ref : (H, 1)    layer-4 weight stored as a column, f32
    b*_ref : (H, 1)/(1, 1) biases stored as columns, f32
    o_ref  : (1, bb)   output tile (lane-dense)
    """
    xt = xt_ref[...]                                       # (2, bb) f32
    w1 = w1_ref[...]                                       # (H, 2) f32

    # Layer 1: K == 2 -> two VPU broadcast-FMAs; a 2-row matmul would waste a
    # full MXU pass.
    h = (w1[:, 0:1] * xt[0:1, :]
         + w1[:, 1:2] * xt[1:2, :]
         + b1_ref[...])                                    # (H, bb) f32
    h = jnp.maximum(h, 0.0)

    # Layers 2/3: (H,H) @ (H,bb) on the MXU with f32 accumulation.  Operand
    # dtype follows the stored weight dtype (bf16 weights -> bf16 MXU passes).
    w2 = w2_ref[...]
    h = jnp.dot(w2, h.astype(w2.dtype),
                preferred_element_type=jnp.float32) + b2_ref[...]
    h = jnp.maximum(h, 0.0)

    w3 = w3_ref[...]
    h = jnp.dot(w3, h.astype(w3.dtype),
                preferred_element_type=jnp.float32) + b3_ref[...]
    h = jnp.maximum(h, 0.0)

    # Layer 4: N == 1 -> VPU multiply + sublane (XLU) reduce, skip the MXU.
    # (Switch to a (1,H)@(H,bb) dot if VALU ever becomes the binder.)
    o = jnp.sum(w4_ref[...] * h, axis=0, keepdims=True) + b4_ref[...]   # (1, bb)
    o_ref[...] = o.astype(o_ref.dtype)


# ---------------------------------------------------------------------------
# VMEM budgeting helpers
# ---------------------------------------------------------------------------
def _round_up(x, m):
    return ((x + m - 1) // m) * m


def _vmem_block_bytes(shape, dtype):
    """Approximate VMEM footprint of a 2-D block after (sublane,128)-lane padding."""
    it = jnp.dtype(dtype).itemsize
    sub = 8 * max(1, 4 // it)          # f32 -> 8 sublanes, bf16 -> 16, int8 -> 32
    r, c = shape
    return _round_up(r, sub) * _round_up(c, 128) * it


def _vmem_capacity_bytes():
    """Trace-time VMEM capacity query with a conservative fallback (v7x = 64 MiB)."""
    try:
        cap = int(pltpu.get_tpu_info().vmem_capacity_bytes)
        if cap > 0:
            return cap
    except Exception:
        pass
    return 64 * 1024 * 1024


# ---------------------------------------------------------------------------
# Wrapper
# ---------------------------------------------------------------------------
def discriminator_forward(x, params, *, block_b=2048, x_transposed=False,
                          matmul_dtype=None):
    """Forward pass of the Discriminator.

    x            : (B, 2) f32, or (2, B) f32 if x_transposed=True (store the
                   dataset transposed once outside the training loop to avoid
                   the extra HBM transpose pass in the mem-bound small-H regime).
    params       : dict from init_params (PyTorch (out,in) weight layout).
    block_b      : max batch tile (multiple of 128); actual tile is capped by a
                   per-chip VMEM budget and split so >=2 tiles exist when B>128.
    matmul_dtype : e.g. jnp.bfloat16 -> cast w2/w3 + activations for the MXU
                   dots (f32 accumulation kept).  Default None = exact f32.
    Returns (B,) f32.
    """
    if x_transposed:
        Fin, B = x.shape
        xt = x
    else:
        B, Fin = x.shape
        xt = x.T                       # layout plumbing; negligible when MXU-bound
    assert Fin == 2

    w1, b1 = params["w1"], params["b1"]
    w2, b2 = params["w2"], params["b2"]
    w3, b3 = params["w3"], params["b3"]
    w4, b4 = params["w4"], params["b4"]
    if matmul_dtype is not None:
        w2 = w2.astype(matmul_dtype)   # halve weight HBM/DMA/VMEM, fewer MXU passes
        w3 = w3.astype(matmul_dtype)
    H = w1.shape[0]

    # ---- VMEM budget: resident (single-buffered) consts + per-lane working set.
    cap = _vmem_capacity_bytes()
    budget = int(cap * 0.75)           # ~25% headroom; well under v7x's 64 MiB
    const_bytes = (
        _vmem_block_bytes((H, 2), w1.dtype) + _vmem_block_bytes((H, 1), b1.dtype)
        + _vmem_block_bytes((H, H), w2.dtype) + _vmem_block_bytes((H, 1), b2.dtype)
        + _vmem_block_bytes((H, H), w3.dtype) + _vmem_block_bytes((H, 1), b3.dtype)
        + _vmem_block_bytes((H, 1), w4.dtype) + _vmem_block_bytes((1, 1), b4.dtype))
    # ~3 live (H, bb) f32 activation slabs + double-buffered x^T / out tiles.
    per_lane = 3 * _round_up(H, 8) * 4 + 2 * 8 * 4 + 2 * 8 * 4
    avail = budget - const_bytes - (2 << 20)
    bb_cap = max(128, (avail // per_lane) // 128 * 128) if avail > 0 else 128

    block_b = max(128, (block_b // 128) * 128)
    if B <= 128:
        bb = B                         # single tile == full array dims: legal block
    else:
        # >=2 balanced tiles so both v7x TensorCores get work; cap by VMEM budget.
        bb = min(block_b, _round_up(pl.cdiv(B, 2), 128), bb_cap)
        bb = max(bb, 128)
    grid = pl.cdiv(B, bb)              # no wrapper-side padding; tail tiles clipped

    def const(shape):
        # Revisited block (same index every step): DMA'd once; Buffered(1) drops
        # the dead second pipeline buffer (8*H^2 B per square weight in f32).
        return pl.BlockSpec(shape, lambda i: (0, 0), pipeline_mode=pl.Buffered(1))

    flops = 2 * B * (2 * H + H * H + H * H + H)
    bytes_accessed = (int(xt.size) * xt.dtype.itemsize + B * 4
                      + sum(int(a.size) * a.dtype.itemsize
                            for a in (w1, b1, w2, b2, w3, b3, w4, b4)))
    cost = pl.CostEstimate(flops=flops, transcendentals=0,
                           bytes_accessed=bytes_accessed)

    out = pl.pallas_call(
        _mlp_kernel,
        out_shape=jax.ShapeDtypeStruct((1, B), jnp.float32),
        grid_spec=pltpu.PrefetchScalarGridSpec(
            num_scalar_prefetch=0,
            grid=(grid,),
            in_specs=[
                pl.BlockSpec((Fin, bb), lambda i: (0, i)),   # x^T tile
                const((H, Fin)), const((H, 1)),              # layer 1
                const((H, H)),   const((H, 1)),              # layer 2
                const((H, H)),   const((H, 1)),              # layer 3
                const((H, 1)),   const((1, 1)),              # layer 4
            ],
            out_specs=pl.BlockSpec((1, bb), lambda i: (0, i)),
        ),
        compiler_params=pltpu.CompilerParams(
            dimension_semantics=("parallel",),               # megacore / 2 v7x TCs
            vmem_limit_bytes=budget),
        cost_estimate=cost,
    )(xt, w1, b1, w2, b2, w3, b3, w4, b4)

    return out[0, :]                                         # view(-1)


# ---------------------------------------------------------------------------
# Parameter init (matches nn.init.kaiming_normal_ + bias.fill_(0))
# ---------------------------------------------------------------------------
def init_params(key, h_dim, dtype=jnp.float32):
    """Kernel-layout params: w1 (H,2), w2/w3 (H,H) in PyTorch (out,in) layout,
    w4 (H,1) column, biases as (out,1) columns."""
    w_shapes = {"w1": (h_dim, 2), "w2": (h_dim, h_dim),
                "w3": (h_dim, h_dim), "w4": (h_dim, 1)}
    fan_in = {"w1": 2, "w2": h_dim, "w3": h_dim, "w4": h_dim}
    b_shapes = {"b1": (h_dim, 1), "b2": (h_dim, 1),
                "b3": (h_dim, 1), "b4": (1, 1)}
    params = {}
    for k, name in zip(jax.random.split(key, 4), ("w1", "w2", "w3", "w4")):
        std = (2.0 / fan_in[name]) ** 0.5
        params[name] = (std * jax.random.normal(k, w_shapes[name])).astype(dtype)
    for name, s in b_shapes.items():
        params[name] = jnp.zeros(s, dtype)
    return params


def _reference(x, p):
    """Pure-JAX f32 reference of the PyTorch forward."""
    dot = functools.partial(jnp.dot, precision=jax.lax.Precision.HIGHEST)
    h = jnp.maximum(dot(x, p["w1"].T) + p["b1"][:, 0], 0.0)
    h = jnp.maximum(dot(h, p["w2"].T) + p["b2"][:, 0], 0.0)
    h = jnp.maximum(dot(h, p["w3"].T) + p["b3"][:, 0], 0.0)
    return (dot(h, p["w4"]) + p["b4"][0]).reshape(-1)


if __name__ == "__main__":
    key = jax.random.PRNGKey(0)
    k_x1, k_x2, k_x3, k_p1, k_p2, k_p3 = jax.random.split(key, 6)

    # Case 1: tiny batch -> single full-batch tile (block == full array dims).
    B1, H1 = 8, 32
    x1 = jax.random.normal(k_x1, (B1, 2), dtype=jnp.float32)
    p1 = init_params(k_p1, H1)
    out1 = jax.jit(discriminator_forward)(x1, p1)
    jax.block_until_ready(out1)
    ref1 = _reference(x1, p1)
    assert out1.shape == (B1,)
    assert jnp.allclose(out1, ref1, atol=1e-4, rtol=1e-4), (
        "max abs err case1 = %f" % float(jnp.max(jnp.abs(out1 - ref1))))

    # Case 2: tiled path with a ragged batch and pre-transposed input
    # ("dataset stored transposed once outside the training loop").  B=1000 ->
    # bb=512, grid=2 (both v7x TCs busy), tail tile clipped on writeback.
    B2, H2 = 1000, 64
    x2 = jax.random.normal(k_x2, (B2, 2), dtype=jnp.float32)
    x2t = jnp.asarray(x2.T)                     # one-time layout change
    p2 = init_params(k_p2, H2)
    fwd2 = jax.jit(functools.partial(discriminator_forward, x_transposed=True))
    out2 = fwd2(x2t, p2)
    jax.block_until_ready(out2)
    ref2 = _reference(x2, p2)
    assert out2.shape == (B2,)
    assert jnp.allclose(out2, ref2, atol=1e-4, rtol=1e-4), (
        "max abs err case2 = %f" % float(jnp.max(jnp.abs(out2 - ref2))))

    # Case 3: bf16 MXU operands for layers 2/3 (v6e/v7x recommendation);
    # f32 accumulation kept, so only a small numeric deviation vs. the f32 ref.
    B3, H3 = 1024, 64
    x3 = jax.random.normal(k_x3, (B3, 2), dtype=jnp.float32)
    p3 = init_params(k_p3, H3)
    fwd3 = jax.jit(functools.partial(discriminator_forward,
                                     matmul_dtype=jnp.bfloat16))
    out3 = fwd3(x3, p3)
    jax.block_until_ready(out3)
    ref3 = _reference(x3, p3)
    assert out3.shape == (B3,)
    assert bool(jnp.all(jnp.isfinite(out3)))
    assert float(jnp.max(jnp.abs(out3 - ref3))) < 0.25, (
        "max abs err case3 (bf16) = %f" % float(jnp.max(jnp.abs(out3 - ref3))))

    print("KERNEL_OK")
</pallas_src>

<mosaic_0001>
module attributes {stable_mosaic.version = 11 : i64} {
  func.func @_mlp_kernel(%arg0: i32, %arg1: memref<2x8xf32, #tpu.memory_space<vmem>>, %arg2: memref<32x2xf32, #tpu.memory_space<vmem>>, %arg3: memref<32x1xf32, #tpu.memory_space<vmem>>, %arg4: memref<32x32xf32, #tpu.memory_space<vmem>>, %arg5: memref<32x1xf32, #tpu.memory_space<vmem>>, %arg6: memref<32x32xf32, #tpu.memory_space<vmem>>, %arg7: memref<32x1xf32, #tpu.memory_space<vmem>>, %arg8: memref<32x1xf32, #tpu.memory_space<vmem>>, %arg9: memref<1x1xf32, #tpu.memory_space<vmem>>, %arg10: memref<1x8xf32, #tpu.memory_space<vmem>>) attributes {dimension_semantics = [#tpu.dimension_semantics<parallel>], iteration_bounds = array<i64: 1>, scalar_prefetch = 0 : i64, scratch_operands = 0 : i64, tpu.core_type = #tpu.core_type<tc>, window_params = [{transform_indices = @transform_0, window_bounds = array<i64: 2, 8>}, {pipeline_mode = #tpu.pipeline_mode<synchronous>, transform_indices = @transform_1, window_bounds = array<i64: 32, 2>}, {pipeline_mode = #tpu.pipeline_mode<synchronous>, transform_indices = @transform_2, window_bounds = array<i64: 32, 1>}, {pipeline_mode = #tpu.pipeline_mode<synchronous>, transform_indices = @transform_3, window_bounds = array<i64: 32, 32>}, {pipeline_mode = #tpu.pipeline_mode<synchronous>, transform_indices = @transform_4, window_bounds = array<i64: 32, 1>}, {pipeline_mode = #tpu.pipeline_mode<synchronous>, transform_indices = @transform_5, window_bounds = array<i64: 32, 32>}, {pipeline_mode = #tpu.pipeline_mode<synchronous>, transform_indices = @transform_6, window_bounds = array<i64: 32, 1>}, {pipeline_mode = #tpu.pipeline_mode<synchronous>, transform_indices = @transform_7, window_bounds = array<i64: 32, 1>}, {pipeline_mode = #tpu.pipeline_mode<synchronous>, transform_indices = @transform_8, window_bounds = array<i64: 1, 1>}, {transform_indices = @transform_9, window_bounds = array<i64: 1, 8>}]} {
    %c0 = arith.constant 0 : index
    %c0_0 = arith.constant 0 : index
    %0 = vector.load %arg1[%c0, %c0_0] : memref<2x8xf32, #tpu.memory_space<vmem>>, vector<2x8xf32>
    %c0_1 = arith.constant 0 : index
    %c0_2 = arith.constant 0 : index
    %1 = vector.load %arg2[%c0_1, %c0_2] : memref<32x2xf32, #tpu.memory_space<vmem>>, vector<32x2xf32>
    %2 = vector.extract_strided_slice %1 {offsets = [0, 0], sizes = [32, 1], strides = [1, 1]} : vector<32x2xf32> to vector<32x1xf32>
    %3 = vector.extract_strided_slice %0 {offsets = [0, 0], sizes = [1, 8], strides = [1, 1]} : vector<2x8xf32> to vector<1x8xf32>
    %4 = vector.broadcast %2 : vector<32x1xf32> to vector<32x8xf32>
    %5 = vector.broadcast %3 : vector<1x8xf32> to vector<32x8xf32>
    %6 = arith.mulf %4, %5 : vector<32x8xf32>
    %7 = vector.extract_strided_slice %1 {offsets = [0, 1], sizes = [32, 1], strides = [1, 1]} : vector<32x2xf32> to vector<32x1xf32>
    %8 = vector.extract_strided_slice %0 {offsets = [1, 0], sizes = [1, 8], strides = [1, 1]} : vector<2x8xf32> to vector<1x8xf32>
    %9 = vector.broadcast %7 : vector<32x1xf32> to vector<32x8xf32>
    %10 = vector.broadcast %8 : vector<1x8xf32> to vector<32x8xf32>
    %11 = arith.mulf %9, %10 : vector<32x8xf32>
    %12 = arith.addf %6, %11 : vector<32x8xf32>
    %c0_3 = arith.constant 0 : index
    %c0_4 = arith.constant 0 : index
    %13 = vector.load %arg3[%c0_3, %c0_4] : memref<32x1xf32, #tpu.memory_space<vmem>>, vector<32x1xf32>
    %14 = vector.broadcast %13 : vector<32x1xf32> to vector<32x8xf32>
    %15 = arith.addf %12, %14 : vector<32x8xf32>
    %cst = arith.constant 0.000000e+00 : f32
    %16 = vector.broadcast %cst : f32 to vector<32x8xf32>
    %17 = arith.maximumf %15, %16 : vector<32x8xf32>
    %c0_5 = arith.constant 0 : index
    %c0_6 = arith.constant 0 : index
    %18 = vector.load %arg4[%c0_5, %c0_6] : memref<32x32xf32, #tpu.memory_space<vmem>>, vector<32x32xf32>
    %cst_7 = arith.constant dense<0.000000e+00> : vector<32x8xf32>
    %19 = tpu.matmul %18, %17, %cst_7 {dimension_numbers = #tpu.dot_dimension_numbers<[1], [0], [0], [1], [0, 0, 1, 1], [], []>} : vector<32x32xf32>, vector<32x8xf32>, vector<32x8xf32> -> vector<32x8xf32>
    %c0_8 = arith.constant 0 : index
    %c0_9 = arith.constant 0 : index
    %20 = vector.load %arg5[%c0_8, %c0_9] : memref<32x1xf32, #tpu.memory_space<vmem>>, vector<32x1xf32>
    %21 = vector.broadcast %20 : vector<32x1xf32> to vector<32x8xf32>
    %22 = arith.addf %19, %21 : vector<32x8xf32>
    %cst_10 = arith.constant 0.000000e+00 : f32
    %23 = vector.broadcast %cst_10 : f32 to vector<32x8xf32>
    %24 = arith.maximumf %22, %23 : vector<32x8xf32>
    %c0_11 = arith.constant 0 : index
    %c0_12 = arith.constant 0 : index
    %25 = vector.load %arg6[%c0_11, %c0_12] : memref<32x32xf32, #tpu.memory_space<vmem>>, vector<32x32xf32>
    %cst_13 = arith.constant dense<0.000000e+00> : vector<32x8xf32>
    %26 = tpu.matmul %25, %24, %cst_13 {dimension_numbers = #tpu.dot_dimension_numbers<[1], [0], [0], [1], [0, 0, 1, 1], [], []>} : vector<32x32xf32>, vector<32x8xf32>, vector<32x8xf32> -> vector<32x8xf32>
    %c0_14 = arith.constant 0 : index
    %c0_15 = arith.constant 0 : index
    %27 = vector.load %arg7[%c0_14, %c0_15] : memref<32x1xf32, #tpu.memory_space<vmem>>, vector<32x1xf32>
    %28 = vector.broadcast %27 : vector<32x1xf32> to vector<32x8xf32>
    %29 = arith.addf %26, %28 : vector<32x8xf32>
    %cst_16 = arith.constant 0.000000e+00 : f32
    %30 = vector.broadcast %cst_16 : f32 to vector<32x8xf32>
    %31 = arith.maximumf %29, %30 : vector<32x8xf32>
    %c0_17 = arith.constant 0 : index
    %c0_18 = arith.constant 0 : index
    %32 = vector.load %arg8[%c0_17, %c0_18] : memref<32x1xf32, #tpu.memory_space<vmem>>, vector<32x1xf32>
    %33 = vector.broadcast %32 : vector<32x1xf32> to vector<32x8xf32>
    %34 = arith.mulf %33, %31 : vector<32x8xf32>
    %cst_19 = arith.constant dense<0.000000e+00> : vector<8xf32>
    %35 = vector.multi_reduction <add>, %34, %cst_19 [0] : vector<32x8xf32> to vector<8xf32>
    %36 = vector.shape_cast %35 : vector<8xf32> to vector<1x8xf32>
    %c0_20 = arith.constant 0 : index
    %c0_21 = arith.constant 0 : index
    %37 = vector.load %arg9[%c0_20, %c0_21] : memref<1x1xf32, #tpu.memory_space<vmem>>, vector<1x1xf32>
    %38 = vector.broadcast %37 : vector<1x1xf32> to vector<1x8xf32>
    %39 = arith.addf %36, %38 : vector<1x8xf32>
    %c0_22 = arith.constant 0 : index
    %c0_23 = arith.constant 0 : index
    %40 = vector.load %arg10[%c0_22, %c0_23] : memref<1x8xf32, #tpu.memory_space<vmem>>, vector<1x8xf32>
    tpu.vector_store %arg10[%c0_22, %c0_23], %39 {strides = array<i32>} : memref<1x8xf32, #tpu.memory_space<vmem>>, vector<1x8xf32>,
    return
  }
  func.func @transform_0(%arg0: i32) -> (i32, i32) {
    %c0_i32 = arith.constant 0 : i32
    %c0_i32_0 = arith.constant 0 : i32
    return %c0_i32, %arg0 : i32, i32
  }
  func.func @transform_1(%arg0: i32) -> (i32, i32) {
    %c0_i32 = arith.constant 0 : i32
    %c0_i32_0 = arith.constant 0 : i32
    %c0_i32_1 = arith.constant 0 : i32
    return %c0_i32, %c0_i32_0 : i32, i32
  }
  func.func @transform_2(%arg0: i32) -> (i32, i32) {
    %c0_i32 = arith.constant 0 : i32
    %c0_i32_0 = arith.constant 0 : i32
    %c0_i32_1 = arith.constant 0 : i32
    return %c0_i32, %c0_i32_0 : i32, i32
  }
  func.func @transform_3(%arg0: i32) -> (i32, i32) {
    %c0_i32 = arith.constant 0 : i32
    %c0_i32_0 = arith.constant 0 : i32
    %c0_i32_1 = arith.constant 0 : i32
    return %c0_i32, %c0_i32_0 : i32, i32
  }
  func.func @transform_4(%arg0: i32) -> (i32, i32) {
    %c0_i32 = arith.constant 0 : i32
    %c0_i32_0 = arith.constant 0 : i32
    %c0_i32_1 = arith.constant 0 : i32
    return %c0_i32, %c0_i32_0 : i32, i32
  }
  func.func @transform_5(%arg0: i32) -> (i32, i32) {
    %c0_i32 = arith.constant 0 : i32
    %c0_i32_0 = arith.constant 0 : i32
    %c0_i32_1 = arith.constant 0 : i32
    return %c0_i32, %c0_i32_0 : i32, i32
  }
  func.func @transform_6(%arg0: i32) -> (i32, i32) {
    %c0_i32 = arith.constant 0 : i32
    %c0_i32_0 = arith.constant 0 : i32
    %c0_i32_1 = arith.constant 0 : i32
    return %c0_i32, %c0_i32_0 : i32, i32
  }
  func.func @transform_7(%arg0: i32) -> (i32, i32) {
    %c0_i32 = arith.constant 0 : i32
    %c0_i32_0 = arith.constant 0 : i32
    %c0_i32_1 = arith.constant 0 : i32
    return %c0_i32, %c0_i32_0 : i32, i32
  }
  func.func @transform_8(%arg0: i32) -> (i32, i32) {
    %c0_i32 = arith.constant 0 : i32
    %c0_i32_0 = arith.constant 0 : i32
    %c0_i32_1 = arith.constant 0 : i32
    return %c0_i32, %c0_i32_0 : i32, i32
  }
  func.func @transform_9(%arg0: i32) -> (i32, i32) {
    %c0_i32 = arith.constant 0 : i32
    %c0_i32_0 = arith.constant 0 : i32
    return %c0_i32, %arg0 : i32, i32
  }
}

</mosaic_0001>

<llo_original>
// kernel: discriminator_forward.1
$region0: #{discriminator_forward.1}
  #allocation0 [shape = 'u32[]', space=smem, size = 0x4, offset = 0x4, fixed_abs, tag = 'smem constant byte address 0x4 - core index']
  #allocation1 [shape = 'u32[72,128]{1,0:T(1,128)}', space=vmem, size = 0x9000, scoped, tag = 'internal scratch']
  #allocation2 [shape = 'f32[1,1]{1,0:T(1,128)S(1)}', space=vmem, size = 0x200, scoped, tag = 'scoped memory for discriminator_forward.1']
  %s0 = inlined_call_operand.vmem [shape: f32[2,8], index: 0, kind: input, shape index: {}]
  %s1 = inlined_call_operand.vmem [shape: f32[32,2], index: 1, kind: input, shape index: {}]
  %s2 = inlined_call_operand.vmem [shape: f32[32,1], index: 2, kind: input, shape index: {}]
  %s3 = inlined_call_operand.vmem [shape: f32[32,32], index: 3, kind: input, shape index: {}]
  %s4 = inlined_call_operand.vmem [shape: f32[32,1], index: 4, kind: input, shape index: {}]
  %s5 = inlined_call_operand.vmem [shape: f32[32,32], index: 5, kind: input, shape index: {}]
  %s6 = inlined_call_operand.vmem [shape: f32[32,1], index: 6, kind: input, shape index: {}]
  %s7 = inlined_call_operand.vmem [shape: f32[32,1], index: 7, kind: input, shape index: {}]
  %s8 = inlined_call_operand.<no memory space> [shape: f32[1,1], index: 8, kind: input, shape index: {}]
  %s9 = inlined_call_operand.hbm [shape: f32[1,8], index: 9, kind: output, shape index: {}]
  %s10 = sld [smem:[#allocation0]]
  $region46: #{discriminator_forward.1} parent=0
    _
  %s12 = ssub.s32 1, %s10
  %s13 = scalar_select 0, %s12, %s10
  %v14 = vstv %s8
  %15 = vst [vmem:[#allocation2] sm:$0x1] %v14
  $region1: #{discriminator_forward.1} parent=0
    #allocation3 [shape = 'u8[512]{0}', space=vmem, size = 0x400, scoped, tag = 'output window, operand 0, single buffered']
    #allocation4 [shape = 's32[1]{0}', space=sflag, size = 0x4, scoped, tag = 'scoped memory for discriminator_forward.1']
    %16 = vsyncpa [#allocation4], 0
    // Predicated region
    $region2: #{discriminator_forward.1} parent=1 // pred_check
      _
    $region3: #{discriminator_forward.1} parent=1 // pred_check_branch
      %18 = sbr.rel (0) target = $region5
    $region4: #{discriminator_forward.1} parent=1 // pred_region
      _
    $region5: #{discriminator_forward.1} parent=1 // pred_fallthru
      _
    // Predicated region
    $region6: #{discriminator_forward.1} parent=1 // pred_check
      _
    $region7: #{discriminator_forward.1} parent=1 // pred_check_branch
      %20 = sbr.rel (0) target = $region9
    $region8: #{discriminator_forward.1} parent=1 // pred_region
      _
    $region9: #{discriminator_forward.1} parent=1 // pred_fallthru
      _
    // Predicated region
    $region10: #{discriminator_forward.1} parent=1 // pred_check
      _
    $region11: #{discriminator_forward.1} parent=1 // pred_check_branch
      %22 = sbr.rel (0) target = $region13
    $region12: #{discriminator_forward.1} parent=1 // pred_region
      _
    $region13: #{discriminator_forward.1} parent=1 // pred_fallthru
      _
    // Predicated region
    $region14: #{discriminator_forward.1} parent=1 // pred_check
      _
    $region15: #{discriminator_forward.1} parent=1 // pred_check_branch
      %24 = sbr.rel (0) target = $region17
    $region16: #{discriminator_forward.1} parent=1 // pred_region
      _
    $region17: #{discriminator_forward.1} parent=1 // pred_fallthru
      _
    // Predicated region
    $region18: #{discriminator_forward.1} parent=1 // pred_check
      _
    $region19: #{discriminator_forward.1} parent=1 // pred_check_branch
      %26 = sbr.rel (0) target = $region21
    $region20: #{discriminator_forward.1} parent=1 // pred_region
      _
    $region21: #{discriminator_forward.1} parent=1 // pred_fallthru
      _
    // Predicated region
    $region22: #{discriminator_forward.1} parent=1 // pred_check
      _
    $region23: #{discriminator_forward.1} parent=1 // pred_check_branch
      %28 = sbr.rel (0) target = $region25
    $region24: #{discriminator_forward.1} parent=1 // pred_region
      _
    $region25: #{discriminator_forward.1} parent=1 // pred_fallthru
      _
    // Predicated region
    $region26: #{discriminator_forward.1} parent=1 // pred_check
      _
    $region27: #{discriminator_forward.1} parent=1 // pred_check_branch
      %30 = sbr.rel (0) target = $region29
    $region28: #{discriminator_forward.1} parent=1 // pred_region
      _
    $region29: #{discriminator_forward.1} parent=1 // pred_fallthru
      _
    // Predicated region
    $region30: #{discriminator_forward.1} parent=1 // pred_check
      _
    $region31: #{discriminator_forward.1} parent=1 // pred_check_branch
      %32 = sbr.rel (0) target = $region33
    $region32: #{discriminator_forward.1} parent=1 // pred_region
      _
    $region33: #{discriminator_forward.1} parent=1 // pred_fallthru
      _
    // Predicated region
    $region34: #{discriminator_forward.1} parent=1 // pred_check
      _
    $region35: #{discriminator_forward.1} parent=1 // pred_check_branch
      %34 = sbr.rel (0) target = $region37
    $region36: #{discriminator_forward.1} parent=1 // pred_region
      _
    $region37: #{discriminator_forward.1} parent=1 // pred_fallthru
      _
    %v35 = vld [vmem:[%s0] sm:$0x3]
    %v36 = vld [vmem:[%s1] sm:$0xff]
    %v37 = vld [vmem:[%s1 + $0x8] sm:$0xff]
    %v38 = vld [vmem:[%s1 + $0x10] sm:$0xff]
    %v39 = vld [vmem:[%s1 + $0x18] sm:$0xff]
    %41 = vset.pattern.permute.xlu0 0
    %42 = vperm.xlu0 %41, %v36
    %v43 = vpop.permute.xlu0 %42
    %46 = vset.pattern.permute.xlu0 0
    %47 = vperm.xlu0 %46, %v37
    %v48 = vpop.permute.xlu0 %47
    %51 = vset.pattern.permute.xlu0 0
    %52 = vperm.xlu0 %51, %v38
    %v53 = vpop.permute.xlu0 %52
    %56 = vset.pattern.permute.xlu0 0
    %57 = vperm.xlu0 %56, %v39
    %v58 = vpop.permute.xlu0 %57
    %v60 = vperm.slane %v35, 0
    %v61 = vmul.f32 %v43, %v60
    %v62 = vmul.f32 %v48, %v60
    %v63 = vmul.f32 %v53, %v60
    %v64 = vmul.f32 %v58, %v60
    %65 = vset.pattern.permute.xlu0 1
    %66 = vperm.xlu0 %65, %v36
    %v67 = vpop.permute.xlu0 %66
    %69 = vset.pattern.permute.xlu0 1
    %70 = vperm.xlu0 %69, %v37
    %v71 = vpop.permute.xlu0 %70
    %73 = vset.pattern.permute.xlu0 1
    %74 = vperm.xlu0 %73, %v38
    %v75 = vpop.permute.xlu0 %74
    %77 = vset.pattern.permute.xlu0 1
    %78 = vperm.xlu0 %77, %v39
    %v79 = vpop.permute.xlu0 %78
    %v81 = vperm.slane %v35, 1
    %v82 = vmul.f32 %v67, %v81
    %v83 = vmul.f32 %v71, %v81
    %v84 = vmul.f32 %v75, %v81
    %v85 = vmul.f32 %v79, %v81
    %v86 = vadd.f32 %v61, %v82
    %v87 = vadd.f32 %v62, %v83
    %v88 = vadd.f32 %v63, %v84
    %v89 = vadd.f32 %v64, %v85
    %v90 = vld [vmem:[%s2] sm:$0xff]
    %v91 = vld [vmem:[%s2 + $0x8] sm:$0xff]
    %v92 = vld [vmem:[%s2 + $0x10] sm:$0xff]
    %v93 = vld [vmem:[%s2 + $0x18] sm:$0xff]
    %95 = vset.pattern.permute.xlu0 0
    %96 = vperm.xlu0 %95, %v90
    %v97 = vpop.permute.xlu0 %96
    %100 = vset.pattern.permute.xlu0 0
    %101 = vperm.xlu0 %100, %v91
    %v102 = vpop.permute.xlu0 %101
    %105 = vset.pattern.permute.xlu0 0
    %106 = vperm.xlu0 %105, %v92
    %v107 = vpop.permute.xlu0 %106
    %110 = vset.pattern.permute.xlu0 0
    %111 = vperm.xlu0 %110, %v93
    %v112 = vpop.permute.xlu0 %111
    %v114 = vadd.f32 %v86, %v97
    %v115 = vadd.f32 %v87, %v102
    %v116 = vadd.f32 %v88, %v107
    %v117 = vadd.f32 %v89, %v112
    %v118 = vmax.f32 %v114, 0.0
    %v119 = vmax.f32 %v115, 0.0
    %v120 = vmax.f32 %v116, 0.0
    %v121 = vmax.f32 %v117, 0.0
    %v122 = vld [vmem:[%s3] sm:$0xff]
    %v123 = vld [vmem:[%s3 + $0x8] sm:$0xff]
    %v124 = vld [vmem:[%s3 + $0x10] sm:$0xff]
    %v125 = vld [vmem:[%s3 + $0x18] sm:$0xff]
    %v126 = vld [vmem:[%s4] sm:$0xff]
    %v127 = vld [vmem:[%s4 + $0x8] sm:$0xff]
    %v128 = vld [vmem:[%s4 + $0x10] sm:$0xff]
    %v129 = vld [vmem:[%s4 + $0x18] sm:$0xff]
    %131 = vset.pattern.permute.xlu0 0
    %132 = vperm.xlu0 %131, %v126
    %v133 = vpop.permute.xlu0 %132
    %136 = vset.pattern.permute.xlu0 0
    %137 = vperm.xlu0 %136, %v127
    %v138 = vpop.permute.xlu0 %137
    %141 = vset.pattern.permute.xlu0 0
    %142 = vperm.xlu0 %141, %v128
    %v143 = vpop.permute.xlu0 %142
    %146 = vset.pattern.permute.xlu0 0
    %147 = vperm.xlu0 %146, %v129
    %v148 = vpop.permute.xlu0 %147
    %vm150 = vcmask 261120
    %v152 = vsel %vm150, %v122, 0
    %v155 = vsel %vm150, %v123, 0
    %v158 = vsel %vm150, %v124, 0
    %v161 = vsel %vm150, %v125, 0
    %163 = vmatpush.msra.mxu0 0.0
    %164 = vmatpush.msra.mxu0 0.0
    %165 = vmatpush.msra.mxu0 0.0
    %166 = vmatpush.msra.mxu0 0.0
    %167 = vmatpush.msra.mxu0 0.0
    %168 = vmatpush.msra.mxu0 0.0
    %169 = vmatpush.msra.mxu0 0.0
    %170 = vmatpush.msra.mxu0 0.0
    %171 = vmatpush.msra.mxu0 0.0
    %172 = vmatpush.msra.mxu0 0.0
    %173 = vmatpush.msra.mxu0 0.0
    %174 = vmatpush.msra.mxu0 0.0
    %175 = vmatpush.msra.mxu0 %v121
    %176 = vmatpush.msra.mxu0 %v120
    %177 = vmatpush.msra.mxu0 %v119
    %178 = vmatpush.msra.mxu0 %v118
    %179 = vmatmul.f32.gmra.mxu0 %v152
    %v180 = vpop.f32.mrf.mxu0
    %v181 = vadd.f32 %v133, %v180
    %182 = vmatmul.f32.gmra.mxu0 %v155
    %v183 = vpop.f32.mrf.mxu0
    %v184 = vadd.f32 %v138, %v183
    %185 = vmatmul.f32.gmra.mxu0 %v158
    %v186 = vpop.f32.mrf.mxu0
    %v187 = vadd.f32 %v143, %v186
    %188 = vmatmul.f32.gmra.mxu0 %v161
    %v189 = vpop.f32.mrf.mxu0
    %v190 = vadd.f32 %v148, %v189
    %191 = vdwg.mxu0
    %v192 = vmax.f32 %v181, 0.0
    %v193 = vmax.f32 %v184, 0.0
    %v194 = vmax.f32 %v187, 0.0
    %v195 = vmax.f32 %v190, 0.0
    %v196 = vld [vmem:[%s5] sm:$0xff]
    %v197 = vld [vmem:[%s5 + $0x8] sm:$0xff]
    %v198 = vld [vmem:[%s5 + $0x10] sm:$0xff]
    %v199 = vld [vmem:[%s5 + $0x18] sm:$0xff]
    %v200 = vld [vmem:[%s6] sm:$0xff]
    %v201 = vld [vmem:[%s6 + $0x8] sm:$0xff]
    %v202 = vld [vmem:[%s6 + $0x10] sm:$0xff]
    %v203 = vld [vmem:[%s6 + $0x18] sm:$0xff]
    %205 = vset.pattern.permute.xlu0 0
    %206 = vperm.xlu0 %205, %v200
    %v207 = vpop.permute.xlu0 %206
    %210 = vset.pattern.permute.xlu0 0
    %211 = vperm.xlu0 %210, %v201
    %v212 = vpop.permute.xlu0 %211
    %215 = vset.pattern.permute.xlu0 0
    %216 = vperm.xlu0 %215, %v202
    %v217 = vpop.permute.xlu0 %216
    %220 = vset.pattern.permute.xlu0 0
    %221 = vperm.xlu0 %220, %v203
    %v222 = vpop.permute.xlu0 %221
    %v225 = vsel %vm150, %v196, 0
    %v228 = vsel %vm150, %v197, 0
    %v231 = vsel %vm150, %v198, 0
    %v234 = vsel %vm150, %v199, 0
    %236 = vmatpush.msra.mxu0 0.0
    %237 = vmatpush.msra.mxu0 0.0
    %238 = vmatpush.msra.mxu0 0.0
    %239 = vmatpush.msra.mxu0 0.0
    %240 = vmatpush.msra.mxu0 0.0
    %241 = vmatpush.msra.mxu0 0.0
    %242 = vmatpush.msra.mxu0 0.0
    %243 = vmatpush.msra.mxu0 0.0
    %244 = vmatpush.msra.mxu0 0.0
    %245 = vmatpush.msra.mxu0 0.0
    %246 = vmatpush.msra.mxu0 0.0
    %247 = vmatpush.msra.mxu0 0.0
    %248 = vmatpush.msra.mxu0 %v195
    %249 = vmatpush.msra.mxu0 %v194
    %250 = vmatpush.msra.mxu0 %v193
    %251 = vmatpush.msra.mxu0 %v192
    %252 = vmatmul.f32.gmra.mxu0 %v225
    %v253 = vpop.f32.mrf.mxu0
    %v254 = vadd.f32 %v207, %v253
    %255 = vmatmul.f32.gmra.mxu0 %v228
    %v256 = vpop.f32.mrf.mxu0
    %v257 = vadd.f32 %v212, %v256
    %258 = vmatmul.f32.gmra.mxu0 %v231
    %v259 = vpop.f32.mrf.mxu0
    %v260 = vadd.f32 %v217, %v259
    %261 = vmatmul.f32.gmra.mxu0 %v234
    %v262 = vpop.f32.mrf.mxu0
    %v263 = vadd.f32 %v222, %v262
    %264 = vdwg.mxu0
    %v265 = vmax.f32 %v254, 0.0
    %v266 = vmax.f32 %v257, 0.0
    %v267 = vmax.f32 %v260, 0.0
    %v268 = vmax.f32 %v263, 0.0
    %v269 = vld [vmem:[%s7] sm:$0xff]
    %v270 = vld [vmem:[%s7 + $0x8] sm:$0xff]
    %v271 = vld [vmem:[%s7 + $0x10] sm:$0xff]
    %v272 = vld [vmem:[%s7 + $0x18] sm:$0xff]
    %274 = vset.pattern.permute.xlu0 0
    %275 = vperm.xlu0 %274, %v269
    %v276 = vpop.permute.xlu0 %275
    %279 = vset.pattern.permute.xlu0 0
    %280 = vperm.xlu0 %279, %v270
    %v281 = vpop.permute.xlu0 %280
    %284 = vset.pattern.permute.xlu0 0
    %285 = vperm.xlu0 %284, %v271
    %v286 = vpop.permute.xlu0 %285
    %289 = vset.pattern.permute.xlu0 0
    %290 = vperm.xlu0 %289, %v272
    %v291 = vpop.permute.xlu0 %290
    %v293 = vmul.f32 %v276, %v265
    %v294 = vmul.f32 %v281, %v266
    %v295 = vmul.f32 %v286, %v267
    %v296 = vmul.f32 %v291, %v268
    %vm297 = vcmask 64512
    %v298 = vsel %vm297, %v293, 0.0
    %v299 = vsel %vm297, %v294, 0.0
    %v300 = vadd.f32 %v298, %v299
    %v301 = vsel %vm297, %v295, 0.0
    %v302 = vadd.f32 %v300, %v301
    %v303 = vsel %vm297, %v296, 0.0
    %v304 = vadd.f32 %v302, %v303
    %v305 = vrot.slane %v304, 4
    %v306 = vadd.f32 %v304, %v305
    %v307 = vrot.slane %v306, 2
    %v308 = vadd.f32 %v306, %v307
    %v309 = vrot.slane %v308, 1
    %v310 = vadd.f32 %v308, %v309
    %v311 = vld [vmem:[#allocation2] sm:$0x1]
    %313 = vset.pattern.permute.xlu0 0
    %314 = vperm.xlu0 %313, %v311
    %v315 = vpop.permute.xlu0 %314
    %v317 = vperm.slane %v315, 0
    %v318 = vadd.f32 %v310, %v317
    %vm319 = vcmask 57344
    %320 = vst.msk [vmem:[#allocation3] sm:$0x1] %vm319, %v318
    // Predicated region
    $region38: #{discriminator_forward.1} parent=1 // pred_check
      _
    $region39: #{discriminator_forward.1} parent=1 // pred_check_branch
      %322 = sbr.rel (0) target = $region41
    $region40: #{discriminator_forward.1} parent=1 // pred_region
      %324 = vsyncadd [#allocation4], 0
      %s326 = sshll.u32 [#allocation3], 4
      %s327 = int_to_ptr.vmem [resolvable:$true] %s326
      %s328 = sshll.u32 %s9, 4
      %s329 = int_to_ptr.hbm [resolvable:$true] %s328
      %331 = dma.vmem_to_hbm [thread:$0]  %s327, 16, %s329, [#allocation4]
    $region41: #{discriminator_forward.1} parent=1 // pred_fallthru
      _
    // Predicated region
    $region42: #{discriminator_forward.1} parent=1 // pred_check
      _
    $region43: #{discriminator_forward.1} parent=1 // pred_check_branch
      %333 = sbr.rel (0) target = $region45
    $region44: #{discriminator_forward.1} parent=1 // pred_region
      %335 = dma.done [#allocation4], 16
    $region45: #{discriminator_forward.1} parent=1 // pred_fallthru
      _
    %336 = vsyncpa [#allocation4], 1

</llo_original>
